<compile_context>
chip_gen: v6e
topology: v6e:2x2x1
jax: 0.10.0
libtpu: 0.0.40
codegen_flags: <defaults>
</compile_context>

<pallas_src>
import functools

import jax
import jax.numpy as jnp
from jax.experimental import pallas as pl
from jax.experimental.pallas import tpu as pltpu


def _sigmoid_diff_window_kernel(si_int_smem, x_ref, k_ref, si_ref, out_ref,
                                gath_ref, *, num_rows, l_true):
    # si_int_smem : (K,)   i32  SMEM  pre-rounded start indices (scalar prefetch)
    # x_ref       : (RK, T_pad) f32   input rows (zero padded to 128-lane mult)
    # k_ref       : (RK, 1) f32       per-row steepness
    # si_ref      : (RK, 1) f32       per-row (float) start index
    # out_ref     : (RK, L_pad) f32   lane-dense output (sliced to L in wrapper)
    # gath_ref    : (RK, L_pad) f32   VMEM scratch holding gathered x windows
    rk, t_pad = x_ref.shape
    l_pad = out_ref.shape[1]

    kk = k_ref[...]                    # (RK, 1)
    si_f = si_ref[...]                 # (RK, 1)

    eps = jnp.float32(1e-6)
    l_f = jnp.float32(l_true)

    # ---- vectorized window, evaluated only at the L_pad sliced positions ----
    si_i32 = jnp.round(si_f).astype(jnp.int32)                     # (RK, 1)
    j_i32 = jax.lax.broadcasted_iota(jnp.int32, (rk, l_pad), 1)    # (RK, Lp)
    tt = (si_i32 + j_i32).astype(jnp.float32)                      # (RK, Lp)

    def sig_softplus(z):
        # sigmoid(softplus(a)) == (1 + e^a) / (2 + e^a); stable with u = e^-|a|:
        #   a > 0 : (1 + u) / (1 + 2u)       a <= 0 : (1 + u) / (2 + u)
        # -> 1 exp + 1 divide per call (was exp + log + exp + divide).
        a = kk * z
        u = jnp.exp(-jnp.abs(a))
        den = jnp.where(a > 0.0, 1.0 + 2.0 * u, 2.0 + u)
        return (1.0 + u) / den

    window = 2.0 * (sig_softplus(tt - (si_f + eps))
                    - sig_softplus(tt - (si_f + l_f + eps)))        # (RK, Lp)
    # Zero the padded lanes j >= L (they are sliced off by the wrapper).
    window = jnp.where(j_i32 < l_true, window, 0.0)

    # ---- gather x[i, si_int + j]: one dynamic lane rotation per row ----
    row_base = pl.program_id(0) * rk

    def gather_row(r, carry):
        g = jnp.minimum(row_base + r, num_rows - 1)   # clamp padded tail rows
        si_r = si_int_smem[g]                          # scalar int32 from SMEM
        shift = jnp.mod(t_pad - si_r, t_pad)           # roll(-si) == roll(T_pad-si)
        row = x_ref[pl.ds(r, 1), :]                    # (1, T_pad)
        rolled = pltpu.roll(row, shift, axis=1)        # rolled[0, j] = row[0, (j+si)%T_pad]
        gath_ref[pl.ds(r, 1), :] = rolled[:, :l_pad]
        return carry

    jax.lax.fori_loop(0, rk, gather_row, 0)

    # ---- vectorized multiply + lane-dense store ----
    out_ref[...] = (gath_ref[...] * window).astype(out_ref.dtype)


def sigmoid_diff_window_2d(x, k_param, start_idx, L, *, row_block=None):
    """x: (K, T) f32, k_param: (K,) f32, start_idx: (K,) f32 -> out: (K, L) f32."""
    K, T = x.shape
    assert k_param.shape == (K,) and start_idx.shape == (K,)
    assert L <= T

    LANES = 128
    t_pad = ((T + LANES - 1) // LANES) * LANES
    l_pad = ((L + LANES - 1) // LANES) * LANES   # <= t_pad since L <= T

    if row_block is None:
        # Tiles up to 256 rows, but keep >= 2 grid steps when K allows so the
        # single "parallel" axis can shard across both v7x TensorCores.
        half_rows = ((pl.cdiv(K, 2) + 7) // 8) * 8
        row_block = max(8, min(256, half_rows))
    if row_block > K:
        row_block = K          # block == full array dim is always legal
    grid = (pl.cdiv(K, row_block),)

    x_pad = x.astype(jnp.float32)
    if t_pad != T:
        x_pad = jnp.pad(x_pad, ((0, 0), (0, t_pad - T)))

    # Pre-rounded start indices -> SMEM via scalar prefetch (drives the gather).
    si_int = jnp.round(start_idx).astype(jnp.int32)
    # Float per-row scalars as (K, 1) columns for the vectorized window math.
    k2 = k_param.reshape(K, 1).astype(jnp.float32)
    si2 = start_idx.reshape(K, 1).astype(jnp.float32)

    cost = pl.CostEstimate(
        flops=20 * K * l_pad + 2 * K * t_pad,
        transcendentals=2 * K * l_pad,
        bytes_accessed=4 * (K * t_pad + K * l_pad + 2 * K),
    )

    kernel = functools.partial(_sigmoid_diff_window_kernel, num_rows=K, l_true=L)

    out_padded = pl.pallas_call(
        kernel,
        out_shape=jax.ShapeDtypeStruct((K, l_pad), x.dtype),
        grid_spec=pltpu.PrefetchScalarGridSpec(
            num_scalar_prefetch=1,
            grid=grid,
            in_specs=[
                pl.BlockSpec((row_block, t_pad), lambda r, si: (r, 0)),
                pl.BlockSpec((row_block, 1), lambda r, si: (r, 0)),
                pl.BlockSpec((row_block, 1), lambda r, si: (r, 0)),
            ],
            out_specs=pl.BlockSpec((row_block, l_pad), lambda r, si: (r, 0)),
            scratch_shapes=[pltpu.VMEM((row_block, l_pad), jnp.float32)],
        ),
        compiler_params=pltpu.CompilerParams(
            dimension_semantics=("parallel",),
            vmem_limit_bytes=48 * 1024 * 1024,   # v5e default scoped limit is 16 MiB
        ),
        cost_estimate=cost,
    )(si_int, x_pad, k2, si2)
    return out_padded[:, :L]


if __name__ == "__main__":
    key = jax.random.PRNGKey(0)
    k_key, s_key, x_key = jax.random.split(key, 3)

    T, K, L = 64, 8, 16

    # Parameter init matching the PyTorch module's __init__.
    k_param = 3.0 + (10.0 - 3.0) * jax.random.uniform(k_key, (K,), dtype=jnp.float32)
    start_idx = (0.5 * (jnp.tanh(jax.random.uniform(s_key, (K,), dtype=jnp.float32)) + 1.0)
                 * (T - L - 1)).astype(jnp.float32)
    x = jax.random.normal(x_key, (K, T), dtype=jnp.float32)

    out = sigmoid_diff_window_2d(x, k_param, start_idx, L)
    out = jax.block_until_ready(out)

    # Pure-JAX reference mirroring the PyTorch per-row forward.
    t = jnp.arange(T, dtype=jnp.float32)
    rows = []
    for i in range(K):
        kk = k_param[i]
        si = start_idx[i]

        def sig(z, kk=kk):
            a = kk * z
            sp = jnp.maximum(a, 0.0) + jnp.log(1.0 + jnp.exp(-jnp.abs(a)))
            return 1.0 / (1.0 + jnp.exp(-sp))

        eps = 1e-6
        window = 2.0 * (sig(t - (si + eps)) - sig(t - (si + float(L) + eps)))
        weighted = x[i] * window
        si_int = int(jnp.round(si))
        rows.append(weighted[si_int:si_int + L])
    out_ref = jnp.stack(rows)

    assert out.shape == (K, L)
    assert jnp.allclose(out, out_ref, atol=1e-5, rtol=1e-5), float(
        jnp.max(jnp.abs(out - out_ref)))

    print("KERNEL_OK")
</pallas_src>

<mosaic_0001>
module attributes {stable_mosaic.version = 11 : i64} {
  func.func @_sigmoid_diff_window_kernel(%arg0: i32, %arg1: memref<8xi32, #tpu.memory_space<smem>>, %arg2: memref<8x128xf32, #tpu.memory_space<vmem>>, %arg3: memref<8x1xf32, #tpu.memory_space<vmem>>, %arg4: memref<8x1xf32, #tpu.memory_space<vmem>>, %arg5: memref<8x128xf32, #tpu.memory_space<vmem>>, %arg6: memref<8x128xf32, #tpu.memory_space<vmem>>) attributes {dimension_semantics = [#tpu.dimension_semantics<parallel>], iteration_bounds = array<i64: 1>, scalar_prefetch = 1 : i64, scratch_operands = 1 : i64, tpu.core_type = #tpu.core_type<tc>, window_params = [{transform_indices = @transform_0, window_bounds = array<i64: 8, 128>}, {transform_indices = @transform_1, window_bounds = array<i64: 8, 1>}, {transform_indices = @transform_2, window_bounds = array<i64: 8, 1>}, {transform_indices = @transform_3, window_bounds = array<i64: 8, 128>}]} {
    %c0 = arith.constant 0 : index
    %c0_0 = arith.constant 0 : index
    %0 = vector.load %arg3[%c0, %c0_0] : memref<8x1xf32, #tpu.memory_space<vmem>>, vector<8x1xf32>
    %c0_1 = arith.constant 0 : index
    %c0_2 = arith.constant 0 : index
    %1 = vector.load %arg4[%c0_1, %c0_2] : memref<8x1xf32, #tpu.memory_space<vmem>>, vector<8x1xf32>
    %2 = math.roundeven %1 : vector<8x1xf32>
    %3 = arith.fptosi %2 : vector<8x1xf32> to vector<8x1xi32>
    %4 = tpu.iota {dimensions = array<i32: 1>} : vector<8x128xi32>
    %5 = vector.broadcast %3 : vector<8x1xi32> to vector<8x128xi32>
    %6 = arith.addi %5, %4 : vector<8x128xi32>
    %7 = arith.sitofp %6 : vector<8x128xi32> to vector<8x128xf32>
    %cst = arith.constant 9.99999997E-7 : f32
    %8 = vector.broadcast %cst : f32 to vector<8x1xf32>
    %9 = arith.addf %1, %8 : vector<8x1xf32>
    %10 = vector.broadcast %9 : vector<8x1xf32> to vector<8x128xf32>
    %11 = arith.subf %7, %10 : vector<8x128xf32>
    %12 = vector.broadcast %0 : vector<8x1xf32> to vector<8x128xf32>
    %13 = arith.mulf %12, %11 : vector<8x128xf32>
    %14 = math.absf %13 : vector<8x128xf32>
    %cst_3 = arith.constant 0.000000e+00 : f32
    %15 = vector.broadcast %cst_3 : f32 to vector<8x128xf32>
    %16 = arith.subf %15, %14 : vector<8x128xf32>
    %17 = math.exp %16 : vector<8x128xf32>
    %cst_4 = arith.constant 0.000000e+00 : f32
    %18 = vector.broadcast %cst_4 : f32 to vector<8x128xf32>
    %19 = arith.cmpf ogt, %13, %18 : vector<8x128xf32>
    %cst_5 = arith.constant 2.000000e+00 : f32
    %20 = vector.broadcast %cst_5 : f32 to vector<8x128xf32>
    %21 = arith.mulf %20, %17 : vector<8x128xf32>
    %cst_6 = arith.constant 1.000000e+00 : f32
    %22 = vector.broadcast %cst_6 : f32 to vector<8x128xf32>
    %23 = arith.addf %22, %21 : vector<8x128xf32>
    %cst_7 = arith.constant 2.000000e+00 : f32
    %24 = vector.broadcast %cst_7 : f32 to vector<8x128xf32>
    %25 = arith.addf %24, %17 : vector<8x128xf32>
    %26 = arith.select %19, %23, %25 : vector<8x128xi1>, vector<8x128xf32>
    %cst_8 = arith.constant 1.000000e+00 : f32
    %27 = vector.broadcast %cst_8 : f32 to vector<8x128xf32>
    %28 = arith.addf %27, %17 : vector<8x128xf32>
    %29 = arith.divf %28, %26 : vector<8x128xf32>
    %cst_9 = arith.constant 1.600000e+01 : f32
    %30 = vector.broadcast %cst_9 : f32 to vector<8x1xf32>
    %31 = arith.addf %1, %30 : vector<8x1xf32>
    %cst_10 = arith.constant 9.99999997E-7 : f32
    %32 = vector.broadcast %cst_10 : f32 to vector<8x1xf32>
    %33 = arith.addf %31, %32 : vector<8x1xf32>
    %34 = vector.broadcast %33 : vector<8x1xf32> to vector<8x128xf32>
    %35 = arith.subf %7, %34 : vector<8x128xf32>
    %36 = vector.broadcast %0 : vector<8x1xf32> to vector<8x128xf32>
    %37 = arith.mulf %36, %35 : vector<8x128xf32>
    %38 = math.absf %37 : vector<8x128xf32>
    %cst_11 = arith.constant 0.000000e+00 : f32
    %39 = vector.broadcast %cst_11 : f32 to vector<8x128xf32>
    %40 = arith.subf %39, %38 : vector<8x128xf32>
    %41 = math.exp %40 : vector<8x128xf32>
    %cst_12 = arith.constant 0.000000e+00 : f32
    %42 = vector.broadcast %cst_12 : f32 to vector<8x128xf32>
    %43 = arith.cmpf ogt, %37, %42 : vector<8x128xf32>
    %cst_13 = arith.constant 2.000000e+00 : f32
    %44 = vector.broadcast %cst_13 : f32 to vector<8x128xf32>
    %45 = arith.mulf %44, %41 : vector<8x128xf32>
    %cst_14 = arith.constant 1.000000e+00 : f32
    %46 = vector.broadcast %cst_14 : f32 to vector<8x128xf32>
    %47 = arith.addf %46, %45 : vector<8x128xf32>
    %cst_15 = arith.constant 2.000000e+00 : f32
    %48 = vector.broadcast %cst_15 : f32 to vector<8x128xf32>
    %49 = arith.addf %48, %41 : vector<8x128xf32>
    %50 = arith.select %43, %47, %49 : vector<8x128xi1>, vector<8x128xf32>
    %cst_16 = arith.constant 1.000000e+00 : f32
    %51 = vector.broadcast %cst_16 : f32 to vector<8x128xf32>
    %52 = arith.addf %51, %41 : vector<8x128xf32>
    %53 = arith.divf %52, %50 : vector<8x128xf32>
    %54 = arith.subf %29, %53 : vector<8x128xf32>
    %cst_17 = arith.constant 2.000000e+00 : f32
    %55 = vector.broadcast %cst_17 : f32 to vector<8x128xf32>
    %56 = arith.mulf %55, %54 : vector<8x128xf32>
    %c16_i32 = arith.constant 16 : i32
    %57 = vector.broadcast %c16_i32 : i32 to vector<8x128xi32>
    %58 = arith.cmpi slt, %4, %57 : vector<8x128xi32>
    %cst_18 = arith.constant 0.000000e+00 : f32
    %59 = vector.broadcast %cst_18 : f32 to vector<8x128xf32>
    %60 = arith.select %58, %56, %59 : vector<8x128xi1>, vector<8x128xf32>
    %c8_i32 = arith.constant 8 : i32
    %61 = arith.muli %arg0, %c8_i32 : i32
    %c0_i32 = arith.constant 0 : i32
    %c8_i32_19 = arith.constant 8 : i32
    %62 = arith.addi %c0_i32, %c8_i32_19 : i32
    %c1_i32 = arith.constant 1 : i32
    scf.for %arg7 = %c0_i32 to %62 step %c1_i32  : i32 {
      %66 = arith.addi %61, %arg7 : i32
      %c7_i32 = arith.constant 7 : i32
      %67 = arith.minsi %66, %c7_i32 : i32
      %68 = arith.index_cast %67 : i32 to index
      %69 = memref.load %arg1[%68] : memref<8xi32, #tpu.memory_space<smem>>
      %c128_i32 = arith.constant 128 : i32
      %70 = arith.subi %c128_i32, %69 : i32
      %c128_i32_25 = arith.constant 128 : i32
      %c0_i32_26 = arith.constant 0 : i32
      %71 = arith.cmpi eq, %c128_i32_25, %c0_i32_26 : i32
      %c1_i32_27 = arith.constant 1 : i32
      %72 = arith.select %71, %c1_i32_27, %c128_i32_25 : i32
      %73 = arith.remsi %70, %72 : i32
      %c0_i32_28 = arith.constant 0 : i32
      %74 = arith.cmpi ne, %73, %c0_i32_28 : i32
      %c0_i32_29 = arith.constant 0 : i32
      %75 = arith.cmpi slt, %73, %c0_i32_29 : i32
      %c0_i32_30 = arith.constant 0 : i32
      %76 = arith.cmpi slt, %72, %c0_i32_30 : i32
      %77 = arith.xori %75, %76 : i1
      %78 = arith.andi %77, %74 : i1
      %79 = arith.addi %73, %72 : i32
      %80 = arith.select %78, %79, %73 : i32
      %81 = arith.index_cast %arg7 : i32 to index
      %c0_31 = arith.constant 0 : index
      %82 = vector.load %arg2[%81, %c0_31] : memref<8x128xf32, #tpu.memory_space<vmem>>, vector<1x128xf32>
      %83 = tpu.dynamic_rotate %82 by %80 dim 1 : vector<1x128xf32>, i32 -> vector<1x128xf32>
      %84 = arith.index_cast %arg7 : i32 to index
      %c0_32 = arith.constant 0 : index
      %85 = vector.load %arg6[%84, %c0_32] : memref<8x128xf32, #tpu.memory_space<vmem>>, vector<1x128xf32>
      tpu.vector_store %arg6[%84, %c0_32], %83 {strides = array<i32>} : memref<8x128xf32, #tpu.memory_space<vmem>>, vector<1x128xf32>,
    }
    %c8_i32_20 = arith.constant 8 : i32
    %c0_21 = arith.constant 0 : index
    %c0_22 = arith.constant 0 : index
    %63 = vector.load %arg6[%c0_21, %c0_22] : memref<8x128xf32, #tpu.memory_space<vmem>>, vector<8x128xf32>
    %64 = arith.mulf %63, %60 : vector<8x128xf32>
    %c0_23 = arith.constant 0 : index
    %c0_24 = arith.constant 0 : index
    %65 = vector.load %arg5[%c0_23, %c0_24] : memref<8x128xf32, #tpu.memory_space<vmem>>, vector<8x128xf32>
    tpu.vector_store %arg5[%c0_23, %c0_24], %64 {strides = array<i32>} : memref<8x128xf32, #tpu.memory_space<vmem>>, vector<8x128xf32>,
    return
  }
  func.func @transform_0(%arg0: i32, %arg1: memref<8xi32, #tpu.memory_space<smem>>) -> (i32, i32) {
    %c0_i32 = arith.constant 0 : i32
    %c0_i32_0 = arith.constant 0 : i32
    return %arg0, %c0_i32 : i32, i32
  }
  func.func @transform_1(%arg0: i32, %arg1: memref<8xi32, #tpu.memory_space<smem>>) -> (i32, i32) {
    %c0_i32 = arith.constant 0 : i32
    %c0_i32_0 = arith.constant 0 : i32
    return %arg0, %c0_i32 : i32, i32
  }
  func.func @transform_2(%arg0: i32, %arg1: memref<8xi32, #tpu.memory_space<smem>>) -> (i32, i32) {
    %c0_i32 = arith.constant 0 : i32
    %c0_i32_0 = arith.constant 0 : i32
    return %arg0, %c0_i32 : i32, i32
  }
  func.func @transform_3(%arg0: i32, %arg1: memref<8xi32, #tpu.memory_space<smem>>) -> (i32, i32) {
    %c0_i32 = arith.constant 0 : i32
    %c0_i32_0 = arith.constant 0 : i32
    return %arg0, %c0_i32 : i32, i32
  }
}

</mosaic_0001>

<llo_original>
// kernel: tpu_custom_call.1
$region0: #{tpu_custom_call.1}
  #allocation0 [shape = 'u32[]', space=smem, size = 0x4, offset = 0x4, fixed_abs, tag = 'smem constant byte address 0x4 - core index']
  #allocation1 [shape = 'u32[144,128]{1,0:T(1,128)}', space=vmem, size = 0x12000, scoped, tag = 'internal scratch']
  #allocation2 [shape = 'f32[8,128]{1,0:T(8,128)}', space=vmem, size = 0x1000, scoped, tag = 'scratch operand']
  #allocation3 [shape = 's32[1]{0}', space=sflag, size = 0x4, scoped, tag = 'scoped memory for tpu_custom_call.1']
  #allocation4 [shape = 'u8[512]{0}', space=smem, size = 0x200, scoped, tag = 'prefetched SMEM operand 0']
  %s0 = inlined_call_operand.vmem [shape: s32[8], index: 0, kind: input, shape index: {}]
  %s1 = inlined_call_operand.vmem [shape: f32[8,128], index: 1, kind: input, shape index: {}]
  %s2 = inlined_call_operand.vmem [shape: f32[8,1], index: 2, kind: input, shape index: {}]
  %s3 = inlined_call_operand.vmem [shape: f32[8,1], index: 3, kind: input, shape index: {}]
  %s4 = inlined_call_operand.hbm [shape: f32[8,128], index: 4, kind: output, shape index: {}]
  %s5 = sld [smem:[#allocation0]]
  $region29: #{tpu_custom_call.1} parent=0
    _
  %s7 = ssub.s32 1, %s5
  %s8 = scalar_select 0, %s7, %s5
  %s9 = sshll.u32 %s0, 4
  %s10 = int_to_ptr.vmem [resolvable:$true] %s9
  %12 = dma.vmem_to_smem %s10, 16, [#allocation4], [#allocation3]
  %13 = dma.done [#allocation3], 16
  %14 = sfence
  $region1: #{tpu_custom_call.1} parent=0
    #allocation5 [shape = 'u8[4096]{0}', space=vmem, size = 0x1000, scoped, tag = 'output window, operand 0, single buffered']
    #allocation6 [shape = 's32[1]{0}', space=sflag, size = 0x4, scoped, tag = 'scoped memory for tpu_custom_call.1']
    %15 = vsyncpa [#allocation6], 0
    // Predicated region
    $region2: #{tpu_custom_call.1} parent=1 // pred_check
      _
    $region3: #{tpu_custom_call.1} parent=1 // pred_check_branch
      %17 = sbr.rel (0) target = $region5
    $region4: #{tpu_custom_call.1} parent=1 // pred_region
      _
    $region5: #{tpu_custom_call.1} parent=1 // pred_fallthru
      _
    // Predicated region
    $region6: #{tpu_custom_call.1} parent=1 // pred_check
      _
    $region7: #{tpu_custom_call.1} parent=1 // pred_check_branch
      %19 = sbr.rel (0) target = $region9
    $region8: #{tpu_custom_call.1} parent=1 // pred_region
      _
    $region9: #{tpu_custom_call.1} parent=1 // pred_fallthru
      _
    // Predicated region
    $region10: #{tpu_custom_call.1} parent=1 // pred_check
      _
    $region11: #{tpu_custom_call.1} parent=1 // pred_check_branch
      %21 = sbr.rel (0) target = $region13
    $region12: #{tpu_custom_call.1} parent=1 // pred_region
      _
    $region13: #{tpu_custom_call.1} parent=1 // pred_fallthru
      _
    %v22 = vld [vmem:[%s2] sm:$0xff]
    %v23 = vld [vmem:[%s3] sm:$0xff]
    %v24 = vcvt.f32.s32.ties.to.even %v23
    %v25 = vlaneseq
    %v26 = vand.u32 %v25, 127
    %27 = vset.pattern.permute.xlu0 0
    %28 = vperm.xlu0 %27, %v24
    %v29 = vpop.permute.xlu0 %28
    %v30 = vadd.s32 %v29, %v26
    %v31 = vcvt.s32.f32 %v30
    %v32 = vadd.f32 %v23, 1e-06
    %34 = vset.pattern.permute.xlu0 0
    %35 = vperm.xlu0 %34, %v32
    %v36 = vpop.permute.xlu0 %35
    %v38 = vsub.f32 %v31, %v36
    %40 = vset.pattern.permute.xlu0 0
    %41 = vperm.xlu0 %40, %v22
    %v42 = vpop.permute.xlu0 %41
    %v44 = vmul.f32 %v42, %v38
    %v45 = vand.u32 2147483647, %v44
    %v46 = vsub.f32 0.0, %v45
    %v47 = vmul.f32 %v46, 1.442695
    %v48 = vpow.pop %v47
    %vm49 = vcmp.gt.f32.partialorder %v44, 0.0
    %v50 = vmul.f32 %v48, 2.0
    %v51 = vadd.f32 %v50, 1.0
    %v52 = vadd.f32 %v48, 2.0
    %v53 = vsel %vm49, %v51, %v52
    %v54 = vadd.f32 %v48, 1.0
    %v55 = vrcp.pop %v53
    %v56 = vmul.f32 %v54, %v55
    %v57 = vadd.f32 %v23, 16.0
    %v58 = vadd.f32 %v57, 1e-06
    %60 = vset.pattern.permute.xlu0 0
    %61 = vperm.xlu0 %60, %v58
    %v62 = vpop.permute.xlu0 %61
    %v64 = vsub.f32 %v31, %v62
    %v65 = vmul.f32 %v42, %v64
    %v66 = vand.u32 2147483647, %v65
    %v67 = vsub.f32 0.0, %v66
    %v68 = vmul.f32 %v67, 1.442695
    %v69 = vpow.pop %v68
    %vm70 = vcmp.gt.f32.partialorder %v65, 0.0
    %v71 = vmul.f32 %v69, 2.0
    %v72 = vadd.f32 %v71, 1.0
    %v73 = vadd.f32 %v69, 2.0
    %v74 = vsel %vm70, %v72, %v73
    %v75 = vadd.f32 %v69, 1.0
    %v76 = vrcp.pop %v74
    %v77 = vmul.f32 %v75, %v76
    %v78 = vsub.f32 %v56, %v77
    %v79 = vmul.f32 %v78, 2.0
    %vm80 = vcmp.lt.s32.totalorder %v26, 16
    %v81 = vsel %vm80, %v79, 0.0
    %s82 = smul.u32 0, 8
    loop: start=0, step=1, limit=8
    $region14: #{tpu_custom_call.1} parent=1 // loop_pre_header
      _
    $region15: #{tpu_custom_call.1} parent=1 // loop_header
      %s84 = sphi 0, %s88
      %p85 = scmp.ge.s32.totalorder %s84, 8
    $region16: #{tpu_custom_call.1} parent=1 // loop_header_branch
      %87 = sbr.rel (%p85) target = $region20
    $region17: #{tpu_custom_call.1} parent=1 // loop_body
      %s89 = sadd.s32 %s82, %s84
      %p90 = scmp.lt.s32.totalorder %s89, 7
      %s91 = scalar_select %p90, %s89, 7
      %s92 = sld [smem:[#allocation4 + %s91]]
      %s93 = ssub.s32 128, %s92
      %p94 = scmp.lt.s32.totalorder %s93, 0
      %s95 = ssub.s32 0, %s93
      %s96 = scalar_select %p94, %s95, %s93
      %s97 = sand.u32 %s96, 127
      %s98 = ssub.s32 0, %s97
      %s99 = scalar_select %p94, %s98, %s97
      %p100 = scmp.ne.s32.totalorder %s99, 0
      %p101 = scmp.lt.s32.totalorder %s99, 0
      %p102 = pnand %p101, %p100
      %p103 = pneg %p102
      %s104 = sadd.s32 %s99, 128
      %s105 = scalar_select %p103, %s104, %s99
      %s106 = scalar_lea.vmem %s1, %s84
      %v107 = vld [vmem:[%s106] sm:$0x1]
      %s108 = sand.u32 %s105, 127
      %s109 = sand.u32 %s108, 127
      %110 = vrot.lane.b32.xlu0 %v107, %s109
      %v111 = vpop.permute.xlu0 %110
      %s112 = scalar_lea.vmem [#allocation2], %s84
      %113 = vst [vmem:[%s112] sm:$0x1] %v111
    $region18: #{tpu_custom_call.1} parent=1 // loop_footer
      %s88 = sadd.s32 1, %s84
    $region19: #{tpu_custom_call.1} parent=1 // loop_footer_branch
      %83 = sbr.rel target = $region15
    $region20: #{tpu_custom_call.1} parent=1 // loop_exit
      _
    %v114 = vld [vmem:[#allocation2] sm:$0xff]
    %v115 = vmul.f32 %v114, %v81
    %116 = vst [vmem:[#allocation5] sm:$0xff] %v115
    // Predicated region
    $region21: #{tpu_custom_call.1} parent=1 // pred_check
      _
    $region22: #{tpu_custom_call.1} parent=1 // pred_check_branch
      %118 = sbr.rel (0) target = $region24
    $region23: #{tpu_custom_call.1} parent=1 // pred_region
      %s120 = ssub.s32 128, 128
      %121 = vsyncadd [#allocation6], %s120
      %s123 = sshll.u32 [#allocation5], 4
      %s124 = int_to_ptr.vmem [resolvable:$true] %s123
      %126 = dma.vmem_to_hbm [thread:$0]  %s124, 128, %s4, [#allocation6]
    $region24: #{tpu_custom_call.1} parent=1 // pred_fallthru
      _
    // Predicated region
    $region25: #{tpu_custom_call.1} parent=1 // pred_check
      _
    $region26: #{tpu_custom_call.1} parent=1 // pred_check_branch
      %128 = sbr.rel (0) target = $region28
    $region27: #{tpu_custom_call.1} parent=1 // pred_region
      %129 = dma.done [#allocation6], 128
    $region28: #{tpu_custom_call.1} parent=1 // pred_fallthru
      _
    %130 = vsyncpa [#allocation6], 1

</llo_original>
